<compile_context>
chip_gen: v6e
topology: v6e:2x2x1
jax: 0.10.0
libtpu: 0.0.40
codegen_flags: <defaults>
</compile_context>

<pallas_src>
import functools

import jax
import jax.numpy as jnp
from jax import lax
from jax.experimental import pallas as pl
from jax.experimental.pallas import tpu as pltpu


def _round_up(n, m):
    return (n + m - 1) // m * m


def _disc_kernel(xc_ref, w1_ref, b1_ref, w2_ref, b2_ref, w3_ref, b3_ref,
                 out_ref, *, precision):
    """One batch tile of the 3-layer MLP (batch on sublanes, features on lanes)."""
    # Layer 1: single dot over the fused [x | cond] features.
    h1 = (jnp.dot(xc_ref[...], w1_ref[...],
                  preferred_element_type=jnp.float32, precision=precision)
          + b1_ref[...])
    h1 = jnp.maximum(h1, 0.0)                                   # ReLU in f32

    # Layer 2.
    h2 = (jnp.dot(h1.astype(w2_ref.dtype), w2_ref[...],
                  preferred_element_type=jnp.float32, precision=precision)
          + b2_ref[...])
    h2 = jnp.maximum(h2, 0.0)                                   # ReLU in f32

    # Layer 3 (H2 -> 1): VPU broadcast-multiply + lane reduction; keeps the
    # MXU free (an M=1 dot would cost a full MXU pass for one output row).
    out = jnp.sum(h2 * w3_ref[...], axis=1, keepdims=True) + b3_ref[...]
    out_ref[...] = out.astype(out_ref.dtype)


def _pick_batch_tile(B, batch_tile):
    """Sublane-aligned for tiny B; 256-aligned (MXU M-tile) and split into
    >= 2 grid steps (v7x dual TensorCore) for larger B."""
    if B <= 256:
        return _round_up(B, 8)
    tb = _round_up(pl.cdiv(B, 2), 256)
    return min(_round_up(batch_tile, 256), tb)


def discriminator_forward(x, cond, params, *, batch_tile=512,
                          compute_dtype=jnp.float32):
    """Pallas implementation of Discriminator.forward(x, cond).

    params weights are stored as (in, out) (transpose of PyTorch), biases as
    (1, out).  compute_dtype=jnp.bfloat16 roughly doubles MXU throughput on
    all of v5e / v6e / v7x (accumulation, bias-add and ReLU stay f32).
    """
    w1, b1, w2, b2, w3, b3 = params
    B, in_dim = x.shape
    cond_dim = cond.shape[1]
    D = in_dim + cond_dim
    H1 = w1.shape[1]
    H2 = w2.shape[1]
    assert w1.shape == (D, H1) and w2.shape == (H1, H2) and w3.shape == (H2, 1)

    tb = _pick_batch_tile(B, batch_tile)
    num_tiles = pl.cdiv(B, tb)

    # Fused concat + dtype cast: one cheap HBM pass.  No batch padding -- the
    # ragged last block is masked by Pallas; padded rows are row-independent
    # garbage that never reaches the (B, 1) output (no cross-batch reduction).
    xc = jnp.concatenate(
        [x.astype(compute_dtype), cond.astype(compute_dtype)], axis=1)

    w1c = w1.astype(compute_dtype)
    w2c = w2.astype(compute_dtype)
    w3r = w3.reshape(1, H2).astype(jnp.float32)      # VPU path -> stays f32
    b1f = b1.reshape(1, H1).astype(jnp.float32)
    b2f = b2.reshape(1, H2).astype(jnp.float32)
    b3f = b3.reshape(1, 1).astype(jnp.float32)

    precision = (lax.Precision.HIGHEST
                 if compute_dtype == jnp.float32 else None)
    kernel = functools.partial(_disc_kernel, precision=precision)

    out = pl.pallas_call(
        kernel,
        out_shape=jax.ShapeDtypeStruct((B, 1), jnp.float32),
        grid_spec=pltpu.PrefetchScalarGridSpec(
            num_scalar_prefetch=0,
            grid=(num_tiles,),
            in_specs=[
                pl.BlockSpec((tb, D), lambda i: (i, 0)),      # [x|cond] tile
                pl.BlockSpec((D, H1), lambda i: (0, 0)),      # W1 (resident)
                pl.BlockSpec((1, H1), lambda i: (0, 0)),      # b1
                pl.BlockSpec((H1, H2), lambda i: (0, 0)),     # W2 (resident)
                pl.BlockSpec((1, H2), lambda i: (0, 0)),      # b2
                pl.BlockSpec((1, H2), lambda i: (0, 0)),      # W3 as a row
                pl.BlockSpec((1, 1), lambda i: (0, 0)),       # b3
            ],
            out_specs=pl.BlockSpec((tb, 1), lambda i: (i, 0)),
        ),
        compiler_params=pltpu.CompilerParams(
            # Batch tiles are independent -> sharded across the two v7x
            # TensorCores whenever the grid has >= 2 steps.
            dimension_semantics=("parallel",),
        ),
    )(xc, w1c, b1f, w2c, b2f, w3r, b3f)
    return out


def init_params(key, input_dim, cond_dim, n_features=64):
    """nn.Linear-style init U(-1/sqrt(fan_in), +1/sqrt(fan_in)); weights (in, out)."""
    D = input_dim + cond_dim
    dims = [(D, n_features * 8), (n_features * 8, n_features * 4),
            (n_features * 4, 1)]
    params = []
    for fan_in, fan_out in dims:
        key, kw, kb = jax.random.split(key, 3)
        bound = 1.0 / jnp.sqrt(jnp.float32(fan_in))
        w = jax.random.uniform(kw, (fan_in, fan_out), jnp.float32, -bound, bound)
        b = jax.random.uniform(kb, (1, fan_out), jnp.float32, -bound, bound)
        params.extend([w, b])
    return tuple(params)


def _reference_forward(x, cond, params):
    """Pure-JAX reference (HIGHEST precision so it is true-f32)."""
    w1, b1, w2, b2, w3, b3 = params
    p = lax.Precision.HIGHEST
    h = jnp.concatenate([x, cond], axis=1)
    h = jnp.maximum(jnp.dot(h, w1, precision=p) + b1, 0.0)
    h = jnp.maximum(jnp.dot(h, w2, precision=p) + b2, 0.0)
    return jnp.dot(h, w3, precision=p) + b3


if __name__ == "__main__":
    # Small shapes consistent with the module: batch=8, input_dim=24,
    # cond_dim=8, n_features=16 -> hidden sizes 128 and 64, output (8, 1).
    B, INPUT_DIM, COND_DIM, NF = 8, 24, 8, 16

    key = jax.random.PRNGKey(0)
    kx, kc, kp = jax.random.split(key, 3)
    x = jax.random.normal(kx, (B, INPUT_DIM), jnp.float32)
    cond = jax.random.normal(kc, (B, COND_DIM), jnp.float32)
    params = init_params(kp, INPUT_DIM, COND_DIM, NF)

    ref = _reference_forward(x, cond, params)

    # f32 path.
    out = jax.block_until_ready(discriminator_forward(x, cond, params))
    assert out.shape == (B, 1), out.shape
    assert jnp.allclose(out, ref, atol=2e-2, rtol=2e-2), "f32 mismatch vs reference"

    # bf16 compute path (recommended on v5e/v6e/v7x): looser tolerance by design.
    out_bf16 = jax.block_until_ready(
        discriminator_forward(x, cond, params, compute_dtype=jnp.bfloat16))
    assert out_bf16.shape == (B, 1), out_bf16.shape
    assert jnp.allclose(out_bf16, ref, atol=2e-1, rtol=2e-1), "bf16 mismatch vs reference"

    print("KERNEL_OK")
</pallas_src>

<mosaic_0001>
module attributes {stable_mosaic.version = 11 : i64} {
  func.func @_disc_kernel(%arg0: i32, %arg1: memref<8x32xf32, #tpu.memory_space<vmem>>, %arg2: memref<32x128xf32, #tpu.memory_space<vmem>>, %arg3: memref<1x128xf32, #tpu.memory_space<vmem>>, %arg4: memref<128x64xf32, #tpu.memory_space<vmem>>, %arg5: memref<1x64xf32, #tpu.memory_space<vmem>>, %arg6: memref<1x64xf32, #tpu.memory_space<vmem>>, %arg7: memref<1x1xf32, #tpu.memory_space<vmem>>, %arg8: memref<8x1xf32, #tpu.memory_space<vmem>>) attributes {dimension_semantics = [#tpu.dimension_semantics<parallel>], iteration_bounds = array<i64: 1>, scalar_prefetch = 0 : i64, scratch_operands = 0 : i64, tpu.core_type = #tpu.core_type<tc>, window_params = [{transform_indices = @transform_0, window_bounds = array<i64: 8, 32>}, {pipeline_mode = #tpu.pipeline_mode<synchronous>, transform_indices = @transform_1, window_bounds = array<i64: 32, 128>}, {pipeline_mode = #tpu.pipeline_mode<synchronous>, transform_indices = @transform_2, window_bounds = array<i64: 1, 128>}, {pipeline_mode = #tpu.pipeline_mode<synchronous>, transform_indices = @transform_3, window_bounds = array<i64: 128, 64>}, {pipeline_mode = #tpu.pipeline_mode<synchronous>, transform_indices = @transform_4, window_bounds = array<i64: 1, 64>}, {pipeline_mode = #tpu.pipeline_mode<synchronous>, transform_indices = @transform_5, window_bounds = array<i64: 1, 64>}, {pipeline_mode = #tpu.pipeline_mode<synchronous>, transform_indices = @transform_6, window_bounds = array<i64: 1, 1>}, {transform_indices = @transform_7, window_bounds = array<i64: 8, 1>}]} {
    %c0 = arith.constant 0 : index
    %c0_0 = arith.constant 0 : index
    %0 = vector.load %arg1[%c0, %c0_0] : memref<8x32xf32, #tpu.memory_space<vmem>>, vector<8x32xf32>
    %c0_1 = arith.constant 0 : index
    %c0_2 = arith.constant 0 : index
    %1 = vector.load %arg2[%c0_1, %c0_2] : memref<32x128xf32, #tpu.memory_space<vmem>>, vector<32x128xf32>
    %cst = arith.constant dense<0.000000e+00> : vector<8x128xf32>
    %2 = tpu.matmul %0, %1, %cst {dimension_numbers = #tpu.dot_dimension_numbers<[1], [0], [0], [1], [0, 0, 1, 1], [], []>, precision = #tpu.contract_precision<fp32>} : vector<8x32xf32>, vector<32x128xf32>, vector<8x128xf32> -> vector<8x128xf32>
    %c0_3 = arith.constant 0 : index
    %c0_4 = arith.constant 0 : index
    %3 = vector.load %arg3[%c0_3, %c0_4] : memref<1x128xf32, #tpu.memory_space<vmem>>, vector<1x128xf32>
    %4 = vector.broadcast %3 : vector<1x128xf32> to vector<8x128xf32>
    %5 = arith.addf %2, %4 : vector<8x128xf32>
    %cst_5 = arith.constant 0.000000e+00 : f32
    %6 = vector.broadcast %cst_5 : f32 to vector<8x128xf32>
    %7 = arith.maximumf %5, %6 : vector<8x128xf32>
    %c0_6 = arith.constant 0 : index
    %c0_7 = arith.constant 0 : index
    %8 = vector.load %arg4[%c0_6, %c0_7] : memref<128x64xf32, #tpu.memory_space<vmem>>, vector<128x64xf32>
    %cst_8 = arith.constant dense<0.000000e+00> : vector<8x64xf32>
    %9 = tpu.matmul %7, %8, %cst_8 {dimension_numbers = #tpu.dot_dimension_numbers<[1], [0], [0], [1], [0, 0, 1, 1], [], []>, precision = #tpu.contract_precision<fp32>} : vector<8x128xf32>, vector<128x64xf32>, vector<8x64xf32> -> vector<8x64xf32>
    %c0_9 = arith.constant 0 : index
    %c0_10 = arith.constant 0 : index
    %10 = vector.load %arg5[%c0_9, %c0_10] : memref<1x64xf32, #tpu.memory_space<vmem>>, vector<1x64xf32>
    %11 = vector.broadcast %10 : vector<1x64xf32> to vector<8x64xf32>
    %12 = arith.addf %9, %11 : vector<8x64xf32>
    %cst_11 = arith.constant 0.000000e+00 : f32
    %13 = vector.broadcast %cst_11 : f32 to vector<8x64xf32>
    %14 = arith.maximumf %12, %13 : vector<8x64xf32>
    %c0_12 = arith.constant 0 : index
    %c0_13 = arith.constant 0 : index
    %15 = vector.load %arg6[%c0_12, %c0_13] : memref<1x64xf32, #tpu.memory_space<vmem>>, vector<1x64xf32>
    %16 = vector.broadcast %15 : vector<1x64xf32> to vector<8x64xf32>
    %17 = arith.mulf %14, %16 : vector<8x64xf32>
    %cst_14 = arith.constant dense<0.000000e+00> : vector<8xf32>
    %18 = vector.multi_reduction <add>, %17, %cst_14 [1] : vector<8x64xf32> to vector<8xf32>
    %19 = vector.shape_cast %18 : vector<8xf32> to vector<8x1xf32>
    %c0_15 = arith.constant 0 : index
    %c0_16 = arith.constant 0 : index
    %20 = vector.load %arg7[%c0_15, %c0_16] : memref<1x1xf32, #tpu.memory_space<vmem>>, vector<1x1xf32>
    %21 = vector.broadcast %20 : vector<1x1xf32> to vector<8x1xf32>
    %22 = arith.addf %19, %21 : vector<8x1xf32>
    %c0_17 = arith.constant 0 : index
    %c0_18 = arith.constant 0 : index
    %23 = vector.load %arg8[%c0_17, %c0_18] : memref<8x1xf32, #tpu.memory_space<vmem>>, vector<8x1xf32>
    tpu.vector_store %arg8[%c0_17, %c0_18], %22 {strides = array<i32>} : memref<8x1xf32, #tpu.memory_space<vmem>>, vector<8x1xf32>,
    return
  }
  func.func @transform_0(%arg0: i32) -> (i32, i32) {
    %c0_i32 = arith.constant 0 : i32
    %c0_i32_0 = arith.constant 0 : i32
    return %arg0, %c0_i32 : i32, i32
  }
  func.func @transform_1(%arg0: i32) -> (i32, i32) {
    %c0_i32 = arith.constant 0 : i32
    %c0_i32_0 = arith.constant 0 : i32
    %c0_i32_1 = arith.constant 0 : i32
    return %c0_i32, %c0_i32_0 : i32, i32
  }
  func.func @transform_2(%arg0: i32) -> (i32, i32) {
    %c0_i32 = arith.constant 0 : i32
    %c0_i32_0 = arith.constant 0 : i32
    %c0_i32_1 = arith.constant 0 : i32
    return %c0_i32, %c0_i32_0 : i32, i32
  }
  func.func @transform_3(%arg0: i32) -> (i32, i32) {
    %c0_i32 = arith.constant 0 : i32
    %c0_i32_0 = arith.constant 0 : i32
    %c0_i32_1 = arith.constant 0 : i32
    return %c0_i32, %c0_i32_0 : i32, i32
  }
  func.func @transform_4(%arg0: i32) -> (i32, i32) {
    %c0_i32 = arith.constant 0 : i32
    %c0_i32_0 = arith.constant 0 : i32
    %c0_i32_1 = arith.constant 0 : i32
    return %c0_i32, %c0_i32_0 : i32, i32
  }
  func.func @transform_5(%arg0: i32) -> (i32, i32) {
    %c0_i32 = arith.constant 0 : i32
    %c0_i32_0 = arith.constant 0 : i32
    %c0_i32_1 = arith.constant 0 : i32
    return %c0_i32, %c0_i32_0 : i32, i32
  }
  func.func @transform_6(%arg0: i32) -> (i32, i32) {
    %c0_i32 = arith.constant 0 : i32
    %c0_i32_0 = arith.constant 0 : i32
    %c0_i32_1 = arith.constant 0 : i32
    return %c0_i32, %c0_i32_0 : i32, i32
  }
  func.func @transform_7(%arg0: i32) -> (i32, i32) {
    %c0_i32 = arith.constant 0 : i32
    %c0_i32_0 = arith.constant 0 : i32
    return %arg0, %c0_i32 : i32, i32
  }
}

</mosaic_0001>

<llo_original>
// kernel: tpu_custom_call.1
$region0: #{tpu_custom_call.1}
  #allocation0 [shape = 'u32[]', space=smem, size = 0x4, offset = 0x4, fixed_abs, tag = 'smem constant byte address 0x4 - core index']
  #allocation1 [shape = 'u32[144,128]{1,0:T(1,128)}', space=vmem, size = 0x12000, scoped, tag = 'internal scratch']
  #allocation2 [shape = 'f32[1,1]{1,0:T(1,128)S(1)}', space=vmem, size = 0x200, scoped, tag = 'scoped memory for tpu_custom_call.1']
  %s0 = inlined_call_operand.vmem [shape: f32[8,32], index: 0, kind: input, shape index: {}]
  %s1 = inlined_call_operand.vmem [shape: f32[32,128], index: 1, kind: input, shape index: {}]
  %s2 = inlined_call_operand.vmem [shape: f32[1,128], index: 2, kind: input, shape index: {}]
  %s3 = inlined_call_operand.vmem [shape: f32[128,64], index: 3, kind: input, shape index: {}]
  %s4 = inlined_call_operand.vmem [shape: f32[1,64], index: 4, kind: input, shape index: {}]
  %s5 = inlined_call_operand.vmem [shape: f32[1,64], index: 5, kind: input, shape index: {}]
  %s6 = inlined_call_operand.<no memory space> [shape: f32[1,1], index: 6, kind: input, shape index: {}]
  %s7 = inlined_call_operand.vmem [shape: f32[8,1], index: 7, kind: output, shape index: {}]
  %s8 = sld [smem:[#allocation0]]
  $region38: #{tpu_custom_call.1} parent=0
    _
  %s10 = ssub.s32 1, %s8
  %s11 = scalar_select 0, %s10, %s8
  %v12 = vstv %s6
  %13 = vst [vmem:[#allocation2] sm:$0x1] %v12
  // Predicated region
  $region2: #{tpu_custom_call.1} parent=0 // pred_check
    _
  $region3: #{tpu_custom_call.1} parent=0 // pred_check_branch
    %15 = sbr.rel (0) target = $region5
  $region4: #{tpu_custom_call.1} parent=0 // pred_region
    _
  $region5: #{tpu_custom_call.1} parent=0 // pred_fallthru
    _
  // Predicated region
  $region6: #{tpu_custom_call.1} parent=0 // pred_check
    _
  $region7: #{tpu_custom_call.1} parent=0 // pred_check_branch
    %17 = sbr.rel (0) target = $region9
  $region8: #{tpu_custom_call.1} parent=0 // pred_region
    _
  $region9: #{tpu_custom_call.1} parent=0 // pred_fallthru
    _
  // Predicated region
  $region10: #{tpu_custom_call.1} parent=0 // pred_check
    _
  $region11: #{tpu_custom_call.1} parent=0 // pred_check_branch
    %19 = sbr.rel (0) target = $region13
  $region12: #{tpu_custom_call.1} parent=0 // pred_region
    _
  $region13: #{tpu_custom_call.1} parent=0 // pred_fallthru
    _
  // Predicated region
  $region14: #{tpu_custom_call.1} parent=0 // pred_check
    _
  $region15: #{tpu_custom_call.1} parent=0 // pred_check_branch
    %21 = sbr.rel (0) target = $region17
  $region16: #{tpu_custom_call.1} parent=0 // pred_region
    _
  $region17: #{tpu_custom_call.1} parent=0 // pred_fallthru
    _
  // Predicated region
  $region18: #{tpu_custom_call.1} parent=0 // pred_check
    _
  $region19: #{tpu_custom_call.1} parent=0 // pred_check_branch
    %23 = sbr.rel (0) target = $region21
  $region20: #{tpu_custom_call.1} parent=0 // pred_region
    _
  $region21: #{tpu_custom_call.1} parent=0 // pred_fallthru
    _
  // Predicated region
  $region22: #{tpu_custom_call.1} parent=0 // pred_check
    _
  $region23: #{tpu_custom_call.1} parent=0 // pred_check_branch
    %25 = sbr.rel (0) target = $region25
  $region24: #{tpu_custom_call.1} parent=0 // pred_region
    _
  $region25: #{tpu_custom_call.1} parent=0 // pred_fallthru
    _
  // Predicated region
  $region26: #{tpu_custom_call.1} parent=0 // pred_check
    _
  $region27: #{tpu_custom_call.1} parent=0 // pred_check_branch
    %27 = sbr.rel (0) target = $region29
  $region28: #{tpu_custom_call.1} parent=0 // pred_region
    _
  $region29: #{tpu_custom_call.1} parent=0 // pred_fallthru
    _
  %v28 = vld [vmem:[%s0] sm:$0xff]
  %v29 = vld [vmem:[%s1] sm:$0xff]
  %v30 = vld [vmem:[%s1 + $0x8] sm:$0xff]
  %v31 = vld [vmem:[%s1 + $0x10] sm:$0xff]
  %v32 = vld [vmem:[%s1 + $0x18] sm:$0xff]
  %v33 = vld [vmem:[%s2] sm:$0x1]
  %v35 = vlaneseq
  %v36 = vshrl.u32 %v35, 7
  %v37 = vsub.s32 0, %v36
  %v38 = vrot.slane %v33, %v37
  %vm40 = vcmask 261120
  %v42 = vsel %vm40, %v28, 0
  %44 = vmatprep.subr.mxu0 0.0
  %45 = vmatpush1.msra.mxu0 0.0
  %46 = vmatprep.subr.mxu0 0.0
  %47 = vmatpush1.msra.mxu0 0.0
  %48 = vmatprep.subr.mxu0 0.0
  %49 = vmatpush1.msra.mxu0 0.0
  %50 = vmatprep.subr.mxu0 0.0
  %51 = vmatpush1.msra.mxu0 0.0
  %52 = vmatprep.subr.mxu0 0.0
  %53 = vmatpush1.msra.mxu0 0.0
  %54 = vmatprep.subr.mxu0 0.0
  %55 = vmatpush1.msra.mxu0 0.0
  %56 = vmatprep.subr.mxu0 0.0
  %57 = vmatpush1.msra.mxu0 0.0
  %58 = vmatprep.subr.mxu0 0.0
  %59 = vmatpush1.msra.mxu0 0.0
  %60 = vmatprep.subr.mxu0 0.0
  %61 = vmatpush1.msra.mxu0 0.0
  %62 = vmatprep.subr.mxu0 0.0
  %63 = vmatpush1.msra.mxu0 0.0
  %64 = vmatprep.subr.mxu0 0.0
  %65 = vmatpush1.msra.mxu0 0.0
  %66 = vmatprep.subr.mxu0 0.0
  %67 = vmatpush1.msra.mxu0 0.0
  %68 = vmatprep.subr.mxu0 0.0
  %v69 = vand.u32 %v32, 4294901760
  %70 = vmatpush1.msra.mxu0 %v69
  %71 = vmatprep.subr.mxu0 0.0
  %v72 = vand.u32 %v31, 4294901760
  %73 = vmatpush1.msra.mxu0 %v72
  %74 = vmatprep.subr.mxu0 0.0
  %v75 = vand.u32 %v30, 4294901760
  %76 = vmatpush1.msra.mxu0 %v75
  %77 = vmatprep.subr.mxu0 0.0
  %v78 = vand.u32 %v29, 4294901760
  %79 = vmatpush1.msra.mxu0 %v78
  %80 = vmatprep.subr.mxu0 0.0
  %81 = vmatpush2.msra.mxu0 0.0
  %82 = vmatprep.subr.mxu0 0.0
  %83 = vmatpush2.msra.mxu0 0.0
  %84 = vmatprep.subr.mxu0 0.0
  %85 = vmatpush2.msra.mxu0 0.0
  %86 = vmatprep.subr.mxu0 0.0
  %87 = vmatpush2.msra.mxu0 0.0
  %88 = vmatprep.subr.mxu0 0.0
  %89 = vmatpush2.msra.mxu0 0.0
  %90 = vmatprep.subr.mxu0 0.0
  %91 = vmatpush2.msra.mxu0 0.0
  %92 = vmatprep.subr.mxu0 0.0
  %93 = vmatpush2.msra.mxu0 0.0
  %94 = vmatprep.subr.mxu0 0.0
  %95 = vmatpush2.msra.mxu0 0.0
  %96 = vmatprep.subr.mxu0 0.0
  %97 = vmatpush2.msra.mxu0 0.0
  %98 = vmatprep.subr.mxu0 0.0
  %99 = vmatpush2.msra.mxu0 0.0
  %100 = vmatprep.subr.mxu0 0.0
  %101 = vmatpush2.msra.mxu0 0.0
  %102 = vmatprep.subr.mxu0 0.0
  %103 = vmatpush2.msra.mxu0 0.0
  %104 = vmatprep.subr.mxu0 0.0
  %105 = vmatpush2.msra.mxu0 0.0
  %106 = vmatprep.subr.mxu0 0.0
  %107 = vmatpush2.msra.mxu0 0.0
  %108 = vmatprep.subr.mxu0 0.0
  %109 = vmatpush2.msra.mxu0 0.0
  %110 = vmatprep.subr.mxu0 0.0
  %111 = vmatpush2.msra.mxu0 0.0
  %112 = vmatprep.mubr.f32.mxu0 0.0
  %v113 = vand.u32 %v42, 4294901760
  %v114 = vsub.f32 %v42, %v113
  %v115 = vand.u32 %v114, 4294901760
  %v116 = vsub.f32 %v114, %v115
  %v117 = vand.u32 %v116, 4294901760
  %118 = vmatmul.mubr.f32.gmra.mxu0 %v117
  %v119 = vpop.f32.mrf.mxu0
  %v120 = vadd.f32 %v38, %v119
  %v121 = vpop.f32.mrf.mxu0
  %122 = vdwg.mxu0
  %123 = vmatprep.subr.mxu0 0.0
  %124 = vmatpush1.msra.mxu0 0.0
  %125 = vmatprep.subr.mxu0 0.0
  %126 = vmatpush1.msra.mxu0 0.0
  %127 = vmatprep.subr.mxu0 0.0
  %128 = vmatpush1.msra.mxu0 0.0
  %129 = vmatprep.subr.mxu0 0.0
  %130 = vmatpush1.msra.mxu0 0.0
  %131 = vmatprep.subr.mxu0 0.0
  %132 = vmatpush1.msra.mxu0 0.0
  %133 = vmatprep.subr.mxu0 0.0
  %134 = vmatpush1.msra.mxu0 0.0
  %135 = vmatprep.subr.mxu0 0.0
  %136 = vmatpush1.msra.mxu0 0.0
  %137 = vmatprep.subr.mxu0 0.0
  %138 = vmatpush1.msra.mxu0 0.0
  %139 = vmatprep.subr.mxu0 0.0
  %140 = vmatpush1.msra.mxu0 0.0
  %141 = vmatprep.subr.mxu0 0.0
  %142 = vmatpush1.msra.mxu0 0.0
  %143 = vmatprep.subr.mxu0 0.0
  %144 = vmatpush1.msra.mxu0 0.0
  %145 = vmatprep.subr.mxu0 0.0
  %146 = vmatpush1.msra.mxu0 0.0
  %147 = vmatprep.subr.mxu0 0.0
  %v148 = vand.u32 %v32, 4294901760
  %v149 = vsub.f32 %v32, %v148
  %v150 = vand.u32 %v149, 4294901760
  %v151 = vsub.f32 %v149, %v150
  %v152 = vand.u32 %v151, 4294901760
  %153 = vmatpush1.msra.mxu0 %v152
  %154 = vmatprep.subr.mxu0 0.0
  %v155 = vand.u32 %v31, 4294901760
  %v156 = vsub.f32 %v31, %v155
  %v157 = vand.u32 %v156, 4294901760
  %v158 = vsub.f32 %v156, %v157
  %v159 = vand.u32 %v158, 4294901760
  %160 = vmatpush1.msra.mxu0 %v159
  %161 = vmatprep.subr.mxu0 0.0
  %v162 = vand.u32 %v30, 4294901760
  %v163 = vsub.f32 %v30, %v162
  %v164 = vand.u32 %v163, 4294901760
  %v165 = vsub.f32 %v163, %v164
  %v166 = vand.u32 %v165, 4294901760
  %167 = vmatpush1.msra.mxu0 %v166
  %168 = vmatprep.subr.mxu0 0.0
  %v169 = vand.u32 %v29, 4294901760
  %v170 = vsub.f32 %v29, %v169
  %v171 = vand.u32 %v170, 4294901760
  %v172 = vsub.f32 %v170, %v171
  %v173 = vand.u32 %v172, 4294901760
  %174 = vmatpush1.msra.mxu0 %v173
  %175 = vmatprep.subr.mxu0 0.0
  %176 = vmatpush2.msra.mxu0 0.0
  %177 = vmatprep.subr.mxu0 0.0
  %178 = vmatpush2.msra.mxu0 0.0
  %179 = vmatprep.subr.mxu0 0.0
  %180 = vmatpush2.msra.mxu0 0.0
  %181 = vmatprep.subr.mxu0 0.0
  %182 = vmatpush2.msra.mxu0 0.0
  %183 = vmatprep.subr.mxu0 0.0
  %184 = vmatpush2.msra.mxu0 0.0
  %185 = vmatprep.subr.mxu0 0.0
  %186 = vmatpush2.msra.mxu0 0.0
  %187 = vmatprep.subr.mxu0 0.0
  %188 = vmatpush2.msra.mxu0 0.0
  %189 = vmatprep.subr.mxu0 0.0
  %190 = vmatpush2.msra.mxu0 0.0
  %191 = vmatprep.subr.mxu0 0.0
  %192 = vmatpush2.msra.mxu0 0.0
  %193 = vmatprep.subr.mxu0 0.0
  %194 = vmatpush2.msra.mxu0 0.0
  %195 = vmatprep.subr.mxu0 0.0
  %196 = vmatpush2.msra.mxu0 0.0
  %197 = vmatprep.subr.mxu0 0.0
  %198 = vmatpush2.msra.mxu0 0.0
  %199 = vmatprep.subr.mxu0 0.0
  %200 = vmatpush2.msra.mxu0 0.0
  %201 = vmatprep.subr.mxu0 0.0
  %202 = vmatpush2.msra.mxu0 0.0
  %203 = vmatprep.subr.mxu0 0.0
  %204 = vmatpush2.msra.mxu0 0.0
  %205 = vmatprep.subr.mxu0 0.0
  %206 = vmatpush2.msra.mxu0 0.0
  %207 = vmatprep.mubr.f32.mxu0 0.0
  %v208 = vand.u32 %v42, 4294901760
  %209 = vmatmul.mubr.f32.gmra.mxu0 %v208
  %v210 = vpop.f32.mrf.mxu0
  %v211 = vadd.f32 %v120, %v210
  %v212 = vpop.f32.mrf.mxu0
  %213 = vdwg.mxu0
  %214 = vmatprep.subr.mxu0 0.0
  %215 = vmatpush1.msra.mxu0 0.0
  %216 = vmatprep.subr.mxu0 0.0
  %217 = vmatpush1.msra.mxu0 0.0
  %218 = vmatprep.subr.mxu0 0.0
  %219 = vmatpush1.msra.mxu0 0.0
  %220 = vmatprep.subr.mxu0 0.0
  %221 = vmatpush1.msra.mxu0 0.0
  %222 = vmatprep.subr.mxu0 0.0
  %223 = vmatpush1.msra.mxu0 0.0
  %224 = vmatprep.subr.mxu0 0.0
  %225 = vmatpush1.msra.mxu0 0.0
  %226 = vmatprep.subr.mxu0 0.0
  %227 = vmatpush1.msra.mxu0 0.0
  %228 = vmatprep.subr.mxu0 0.0
  %229 = vmatpush1.msra.mxu0 0.0
  %230 = vmatprep.subr.mxu0 0.0
  %231 = vmatpush1.msra.mxu0 0.0
  %232 = vmatprep.subr.mxu0 0.0
  %233 = vmatpush1.msra.mxu0 0.0
  %234 = vmatprep.subr.mxu0 0.0
  %235 = vmatpush1.msra.mxu0 0.0
  %236 = vmatprep.subr.mxu0 0.0
  %237 = vmatpush1.msra.mxu0 0.0
  %238 = vmatprep.subr.mxu0 0.0
  %v239 = vand.u32 %v32, 4294901760
  %v240 = vsub.f32 %v32, %v239
  %241 = vmatpush1.msra.mxu0 %v240
  %242 = vmatprep.subr.mxu0 0.0
  %v243 = vand.u32 %v31, 4294901760
  %v244 = vsub.f32 %v31, %v243
  %245 = vmatpush1.msra.mxu0 %v244
  %246 = vmatprep.subr.mxu0 0.0
  %v247 = vand.u32 %v30, 4294901760
  %v248 = vsub.f32 %v30, %v247
  %249 = vmatpush1.msra.mxu0 %v248
  %250 = vmatprep.subr.mxu0 0.0
  %v251 = vand.u32 %v29, 4294901760
  %v252 = vsub.f32 %v29, %v251
  %253 = vmatpush1.msra.mxu0 %v252
  %254 = vmatprep.subr.mxu0 0.0
  %255 = vmatpush2.msra.mxu0 0.0
  %256 = vmatprep.subr.mxu0 0.0
  %257 = vmatpush2.msra.mxu0 0.0
  %258 = vmatprep.subr.mxu0 0.0
  %259 = vmatpush2.msra.mxu0 0.0
  %260 = vmatprep.subr.mxu0 0.0
  %261 = vmatpush2.msra.mxu0 0.0
  %262 = vmatprep.subr.mxu0 0.0
  %263 = vmatpush2.msra.mxu0 0.0
  %264 = vmatprep.subr.mxu0 0.0
  %265 = vmatpush2.msra.mxu0 0.0
  %266 = vmatprep.subr.mxu0 0.0
  %267 = vmatpush2.msra.mxu0 0.0
  %268 = vmatprep.subr.mxu0 0.0
  %269 = vmatpush2.msra.mxu0 0.0
  %270 = vmatprep.subr.mxu0 0.0
  %271 = vmatpush2.msra.mxu0 0.0
  %272 = vmatprep.subr.mxu0 0.0
  %273 = vmatpush2.msra.mxu0 0.0
  %274 = vmatprep.subr.mxu0 0.0
  %275 = vmatpush2.msra.mxu0 0.0
  %276 = vmatprep.subr.mxu0 0.0
  %277 = vmatpush2.msra.mxu0 0.0
  %278 = vmatprep.subr.mxu0 0.0
  %279 = vmatpush2.msra.mxu0 0.0
  %280 = vmatprep.subr.mxu0 0.0
  %281 = vmatpush2.msra.mxu0 0.0
  %282 = vmatprep.subr.mxu0 0.0
  %283 = vmatpush2.msra.mxu0 0.0
  %284 = vmatprep.subr.mxu0 0.0
  %285 = vmatpush2.msra.mxu0 0.0
  %286 = vmatprep.mubr.f32.mxu0 0.0
  %v287 = vand.u32 %v42, 4294901760
  %v288 = vsub.f32 %v42, %v287
  %289 = vmatmul.mubr.f32.gmra.mxu0 %v288
  %v290 = vpop.f32.mrf.mxu0
  %v291 = vadd.f32 %v211, %v290
  %v292 = vpop.f32.mrf.mxu0
  %293 = vdwg.mxu0
  %294 = vmatprep.subr.mxu0 0.0
  %295 = vmatpush1.msra.mxu0 0.0
  %296 = vmatprep.subr.mxu0 0.0
  %297 = vmatpush1.msra.mxu0 0.0
  %298 = vmatprep.subr.mxu0 0.0
  %299 = vmatpush1.msra.mxu0 0.0
  %300 = vmatprep.subr.mxu0 0.0
  %301 = vmatpush1.msra.mxu0 0.0
  %302 = vmatprep.subr.mxu0 0.0
  %303 = vmatpush1.msra.mxu0 0.0
  %304 = vmatprep.subr.mxu0 0.0
  %305 = vmatpush1.msra.mxu0 0.0
  %306 = vmatprep.subr.mxu0 0.0
  %307 = vmatpush1.msra.mxu0 0.0
  %308 = vmatprep.subr.mxu0 0.0
  %309 = vmatpush1.msra.mxu0 0.0
  %310 = vmatprep.subr.mxu0 0.0
  %311 = vmatpush1.msra.mxu0 0.0
  %312 = vmatprep.subr.mxu0 0.0
  %313 = vmatpush1.msra.mxu0 0.0
  %314 = vmatprep.subr.mxu0 0.0
  %315 = vmatpush1.msra.mxu0 0.0
  %316 = vmatprep.subr.mxu0 0.0
  %317 = vmatpush1.msra.mxu0 0.0
  %318 = vmatprep.subr.mxu0 0.0
  %v319 = vand.u32 %v32, 4294901760
  %320 = vmatpush1.msra.mxu0 %v319
  %321 = vmatprep.subr.mxu0 0.0
  %v322 = vand.u32 %v31, 4294901760
  %323 = vmatpush1.msra.mxu0 %v322
  %324 = vmatprep.subr.mxu0 0.0
  %v325 = vand.u32 %v30, 4294901760
  %326 = vmatpush1.msra.mxu0 %v325
  %327 = vmatprep.subr.mxu0 0.0
  %v328 = vand.u32 %v29, 4294901760
  %329 = vmatpush1.msra.mxu0 %v328
  %330 = vmatprep.subr.mxu0 0.0
  %331 = vmatpush2.msra.mxu0 0.0
  %332 = vmatprep.subr.mxu0 0.0
  %333 = vmatpush2.msra.mxu0 0.0
  %334 = vmatprep.subr.mxu0 0.0
  %335 = vmatpush2.msra.mxu0 0.0
  %336 = vmatprep.subr.mxu0 0.0
  %337 = vmatpush2.msra.mxu0 0.0
  %338 = vmatprep.subr.mxu0 0.0
  %339 = vmatpush2.msra.mxu0 0.0
  %340 = vmatprep.subr.mxu0 0.0
  %341 = vmatpush2.msra.mxu0 0.0
  %342 = vmatprep.subr.mxu0 0.0
  %343 = vmatpush2.msra.mxu0 0.0
  %344 = vmatprep.subr.mxu0 0.0
  %345 = vmatpush2.msra.mxu0 0.0
  %346 = vmatprep.subr.mxu0 0.0
  %347 = vmatpush2.msra.mxu0 0.0
  %348 = vmatprep.subr.mxu0 0.0
  %349 = vmatpush2.msra.mxu0 0.0
  %350 = vmatprep.subr.mxu0 0.0
  %351 = vmatpush2.msra.mxu0 0.0
  %352 = vmatprep.subr.mxu0 0.0
  %353 = vmatpush2.msra.mxu0 0.0
  %354 = vmatprep.subr.mxu0 0.0
  %355 = vmatpush2.msra.mxu0 0.0
  %356 = vmatprep.subr.mxu0 0.0
  %357 = vmatpush2.msra.mxu0 0.0
  %358 = vmatprep.subr.mxu0 0.0
  %359 = vmatpush2.msra.mxu0 0.0
  %360 = vmatprep.subr.mxu0 0.0
  %361 = vmatpush2.msra.mxu0 0.0
  %362 = vmatprep.mubr.f32.mxu0 0.0
  %v363 = vand.u32 %v42, 4294901760
  %v364 = vsub.f32 %v42, %v363
  %v365 = vand.u32 %v364, 4294901760
  %366 = vmatmul.mubr.f32.gmra.mxu0 %v365
  %v367 = vpop.f32.mrf.mxu0
  %v368 = vadd.f32 %v291, %v367
  %v369 = vpop.f32.mrf.mxu0
  %370 = vdwg.mxu0
  %371 = vmatprep.subr.mxu0 0.0
  %372 = vmatpush1.msra.mxu0 0.0
  %373 = vmatprep.subr.mxu0 0.0
  %374 = vmatpush1.msra.mxu0 0.0
  %375 = vmatprep.subr.mxu0 0.0
  %376 = vmatpush1.msra.mxu0 0.0
  %377 = vmatprep.subr.mxu0 0.0
  %378 = vmatpush1.msra.mxu0 0.0
  %379 = vmatprep.subr.mxu0 0.0
  %380 = vmatpush1.msra.mxu0 0.0
  %381 = vmatprep.subr.mxu0 0.0
  %382 = vmatpush1.msra.mxu0 0.0
  %383 = vmatprep.subr.mxu0 0.0
  %384 = vmatpush1.msra.mxu0 0.0
  %385 = vmatprep.subr.mxu0 0.0
  %386 = vmatpush1.msra.mxu0 0.0
  %387 = vmatprep.subr.mxu0 0.0
  %388 = vmatpush1.msra.mxu0 0.0
  %389 = vmatprep.subr.mxu0 0.0
  %390 = vmatpush1.msra.mxu0 0.0
  %391 = vmatprep.subr.mxu0 0.0
  %392 = vmatpush1.msra.mxu0 0.0
  %393 = vmatprep.subr.mxu0 0.0
  %394 = vmatpush1.msra.mxu0 0.0
  %395 = vmatprep.subr.mxu0 0.0
  %v396 = vand.u32 %v32, 4294901760
  %v397 = vsub.f32 %v32, %v396
  %v398 = vand.u32 %v397, 4294901760
  %399 = vmatpush1.msra.mxu0 %v398
  %400 = vmatprep.subr.mxu0 0.0
  %v401 = vand.u32 %v31, 4294901760
  %v402 = vsub.f32 %v31, %v401
  %v403 = vand.u32 %v402, 4294901760
  %404 = vmatpush1.msra.mxu0 %v403
  %405 = vmatprep.subr.mxu0 0.0
  %v406 = vand.u32 %v30, 4294901760
  %v407 = vsub.f32 %v30, %v406
  %v408 = vand.u32 %v407, 4294901760
  %409 = vmatpush1.msra.mxu0 %v408
  %410 = vmatprep.subr.mxu0 0.0
  %v411 = vand.u32 %v29, 4294901760
  %v412 = vsub.f32 %v29, %v411
  %v413 = vand.u32 %v412, 4294901760
  %414 = vmatpush1.msra.mxu0 %v413
  %415 = vmatprep.subr.mxu0 0.0
  %416 = vmatpush2.msra.mxu0 0.0
  %417 = vmatprep.subr.mxu0 0.0
  %418 = vmatpush2.msra.mxu0 0.0
  %419 = vmatprep.subr.mxu0 0.0
  %420 = vmatpush2.msra.mxu0 0.0
  %421 = vmatprep.subr.mxu0 0.0
  %422 = vmatpush2.msra.mxu0 0.0
  %423 = vmatprep.subr.mxu0 0.0
  %424 = vmatpush2.msra.mxu0 0.0
  %425 = vmatprep.subr.mxu0 0.0
  %426 = vmatpush2.msra.mxu0 0.0
  %427 = vmatprep.subr.mxu0 0.0
  %428 = vmatpush2.msra.mxu0 0.0
  %429 = vmatprep.subr.mxu0 0.0
  %430 = vmatpush2.msra.mxu0 0.0
  %431 = vmatprep.subr.mxu0 0.0
  %432 = vmatpush2.msra.mxu0 0.0
  %433 = vmatprep.subr.mxu0 0.0
  %434 = vmatpush2.msra.mxu0 0.0
  %435 = vmatprep.subr.mxu0 0.0
  %436 = vmatpush2.msra.mxu0 0.0
  %437 = vmatprep.subr.mxu0 0.0
  %438 = vmatpush2.msra.mxu0 0.0
  %439 = vmatprep.subr.mxu0 0.0
  %440 = vmatpush2.msra.mxu0 0.0
  %441 = vmatprep.subr.mxu0 0.0
  %442 = vmatpush2.msra.mxu0 0.0
  %443 = vmatprep.subr.mxu0 0.0
  %444 = vmatpush2.msra.mxu0 0.0
  %445 = vmatprep.subr.mxu0 0.0
  %446 = vmatpush2.msra.mxu0 0.0
  %447 = vmatprep.mubr.f32.mxu0 0.0
  %v448 = vand.u32 %v42, 4294901760
  %449 = vmatmul.mubr.f32.gmra.mxu0 %v448
  %v450 = vpop.f32.mrf.mxu0
  %v451 = vadd.f32 %v368, %v450
  %v452 = vpop.f32.mrf.mxu0
  %453 = vdwg.mxu0
  %454 = vmatprep.subr.mxu0 0.0
  %455 = vmatpush1.msra.mxu0 0.0
  %456 = vmatprep.subr.mxu0 0.0
  %457 = vmatpush1.msra.mxu0 0.0
  %458 = vmatprep.subr.mxu0 0.0
  %459 = vmatpush1.msra.mxu0 0.0
  %460 = vmatprep.subr.mxu0 0.0
  %461 = vmatpush1.msra.mxu0 0.0
  %462 = vmatprep.subr.mxu0 0.0
  %463 = vmatpush1.msra.mxu0 0.0
  %464 = vmatprep.subr.mxu0 0.0
  %465 = vmatpush1.msra.mxu0 0.0
  %466 = vmatprep.subr.mxu0 0.0
  %467 = vmatpush1.msra.mxu0 0.0
  %468 = vmatprep.subr.mxu0 0.0
  %469 = vmatpush1.msra.mxu0 0.0
  %470 = vmatprep.subr.mxu0 0.0
  %471 = vmatpush1.msra.mxu0 0.0
  %472 = vmatprep.subr.mxu0 0.0
  %473 = vmatpush1.msra.mxu0 0.0
  %474 = vmatprep.subr.mxu0 0.0
  %475 = vmatpush1.msra.mxu0 0.0
  %476 = vmatprep.subr.mxu0 0.0
  %477 = vmatpush1.msra.mxu0 0.0
  %478 = vmatprep.subr.mxu0 0.0
  %v479 = vand.u32 %v32, 4294901760
  %480 = vmatpush1.msra.mxu0 %v479
  %481 = vmatprep.subr.mxu0 0.0
  %v482 = vand.u32 %v31, 4294901760
  %483 = vmatpush1.msra.mxu0 %v482
  %484 = vmatprep.subr.mxu0 0.0
  %v485 = vand.u32 %v30, 4294901760
  %486 = vmatpush1.msra.mxu0 %v485
  %487 = vmatprep.subr.mxu0 0.0
  %v488 = vand.u32 %v29, 4294901760
  %489 = vmatpush1.msra.mxu0 %v488
  %490 = vmatprep.subr.mxu0 0.0
  %491 = vmatpush2.msra.mxu0 0.0
  %492 = vmatprep.subr.mxu0 0.0
  %493 = vmatpush2.msra.mxu0 0.0
  %494 = vmatprep.subr.mxu0 0.0
  %495 = vmatpush2.msra.mxu0 0.0
  %496 = vmatprep.subr.mxu0 0.0
  %497 = vmatpush2.msra.mxu0 0.0
  %498 = vmatprep.subr.mxu0 0.0
  %499 = vmatpush2.msra.mxu0 0.0
  %500 = vmatprep.subr.mxu0 0.0
  %501 = vmatpush2.msra.mxu0 0.0
  %502 = vmatprep.subr.mxu0 0.0
  %503 = vmatpush2.msra.mxu0 0.0
  %504 = vmatprep.subr.mxu0 0.0
  %505 = vmatpush2.msra.mxu0 0.0
  %506 = vmatprep.subr.mxu0 0.0
  %507 = vmatpush2.msra.mxu0 0.0
  %508 = vmatprep.subr.mxu0 0.0
  %509 = vmatpush2.msra.mxu0 0.0
  %510 = vmatprep.subr.mxu0 0.0
  %511 = vmatpush2.msra.mxu0 0.0
  %512 = vmatprep.subr.mxu0 0.0
  %513 = vmatpush2.msra.mxu0 0.0
  %514 = vmatprep.subr.mxu0 0.0
  %515 = vmatpush2.msra.mxu0 0.0
  %516 = vmatprep.subr.mxu0 0.0
  %517 = vmatpush2.msra.mxu0 0.0
  %518 = vmatprep.subr.mxu0 0.0
  %519 = vmatpush2.msra.mxu0 0.0
  %520 = vmatprep.subr.mxu0 0.0
  %521 = vmatpush2.msra.mxu0 0.0
  %522 = vmatprep.mubr.f32.mxu0 0.0
  %v523 = vand.u32 %v42, 4294901760
  %524 = vmatmul.mubr.f32.gmra.mxu0 %v523
  %v525 = vpop.f32.mrf.mxu0
  %v526 = vadd.f32 %v451, %v525
  %v527 = vpop.f32.mrf.mxu0
  %528 = vdwg.mxu0
  %v529 = vmax.f32 %v526, 0.0
  %v530 = vld [vmem:[%s3] sm:$0xff]
  %v531 = vld [vmem:[%s3 + $0x8] sm:$0xff]
  %v532 = vld [vmem:[%s3 + $0x10] sm:$0xff]
  %v533 = vld [vmem:[%s3 + $0x18] sm:$0xff]
  %v534 = vld [vmem:[%s3 + $0x20] sm:$0xff]
  %v535 = vld [vmem:[%s3 + $0x28] sm:$0xff]
  %v536 = vld [vmem:[%s3 + $0x30] sm:$0xff]
  %v537 = vld [vmem:[%s3 + $0x38] sm:$0xff]
  %v538 = vld [vmem:[%s3 + $0x40] sm:$0xff]
  %v539 = vld [vmem:[%s3 + $0x48] sm:$0xff]
  %v540 = vld [vmem:[%s3 + $0x50] sm:$0xff]
  %v541 = vld [vmem:[%s3 + $0x58] sm:$0xff]
  %v542 = vld [vmem:[%s3 + $0x60] sm:$0xff]
  %v543 = vld [vmem:[%s3 + $0x68] sm:$0xff]
  %v544 = vld [vmem:[%s3 + $0x70] sm:$0xff]
  %v545 = vld [vmem:[%s3 + $0x78] sm:$0xff]
  %v546 = vld [vmem:[%s4] sm:$0x1]
  %v548 = vlaneseq
  %v549 = vshrl.u32 %v548, 7
  %v550 = vsub.s32 0, %v549
  %v551 = vrot.slane %v546, %v550
  %553 = vmatprep.subr.mxu0 0.0
  %v554 = vand.u32 %v545, 4294901760
  %555 = vmatpush1.msra.mxu0 %v554
  %556 = vmatprep.subr.mxu0 0.0
  %v557 = vand.u32 %v544, 4294901760
  %558 = vmatpush1.msra.mxu0 %v557
  %559 = vmatprep.subr.mxu0 0.0
  %v560 = vand.u32 %v543, 4294901760
  %561 = vmatpush1.msra.mxu0 %v560
  %562 = vmatprep.subr.mxu0 0.0
  %v563 = vand.u32 %v542, 4294901760
  %564 = vmatpush1.msra.mxu0 %v563
  %565 = vmatprep.subr.mxu0 0.0
  %v566 = vand.u32 %v541, 4294901760
  %567 = vmatpush1.msra.mxu0 %v566
  %568 = vmatprep.subr.mxu0 0.0
  %v569 = vand.u32 %v540, 4294901760
  %570 = vmatpush1.msra.mxu0 %v569
  %571 = vmatprep.subr.mxu0 0.0
  %v572 = vand.u32 %v539, 4294901760
  %573 = vmatpush1.msra.mxu0 %v572
  %574 = vmatprep.subr.mxu0 0.0
  %v575 = vand.u32 %v538, 4294901760
  %576 = vmatpush1.msra.mxu0 %v575
  %577 = vmatprep.subr.mxu0 0.0
  %v578 = vand.u32 %v537, 4294901760
  %579 = vmatpush1.msra.mxu0 %v578
  %580 = vmatprep.subr.mxu0 0.0
  %v581 = vand.u32 %v536, 4294901760
  %582 = vmatpush1.msra.mxu0 %v581
  %583 = vmatprep.subr.mxu0 0.0
  %v584 = vand.u32 %v535, 4294901760
  %585 = vmatpush1.msra.mxu0 %v584
  %586 = vmatprep.subr.mxu0 0.0
  %v587 = vand.u32 %v534, 4294901760
  %588 = vmatpush1.msra.mxu0 %v587
  %589 = vmatprep.subr.mxu0 0.0
  %v590 = vand.u32 %v533, 4294901760
  %591 = vmatpush1.msra.mxu0 %v590
  %592 = vmatprep.subr.mxu0 0.0
  %v593 = vand.u32 %v532, 4294901760
  %594 = vmatpush1.msra.mxu0 %v593
  %595 = vmatprep.subr.mxu0 0.0
  %v596 = vand.u32 %v531, 4294901760
  %597 = vmatpush1.msra.mxu0 %v596
  %598 = vmatprep.subr.mxu0 0.0
  %v599 = vand.u32 %v530, 4294901760
  %600 = vmatpush1.msra.mxu0 %v599
  %601 = vmatprep.subr.mxu0 0.0
  %602 = vmatpush2.msra.mxu0 0.0
  %603 = vmatprep.subr.mxu0 0.0
  %604 = vmatpush2.msra.mxu0 0.0
  %605 = vmatprep.subr.mxu0 0.0
  %606 = vmatpush2.msra.mxu0 0.0
  %607 = vmatprep.subr.mxu0 0.0
  %608 = vmatpush2.msra.mxu0 0.0
  %609 = vmatprep.subr.mxu0 0.0
  %610 = vmatpush2.msra.mxu0 0.0
  %611 = vmatprep.subr.mxu0 0.0
  %612 = vmatpush2.msra.mxu0 0.0
  %613 = vmatprep.subr.mxu0 0.0
  %614 = vmatpush2.msra.mxu0 0.0
  %615 = vmatprep.subr.mxu0 0.0
  %616 = vmatpush2.msra.mxu0 0.0
  %617 = vmatprep.subr.mxu0 0.0
  %618 = vmatpush2.msra.mxu0 0.0
  %619 = vmatprep.subr.mxu0 0.0
  %620 = vmatpush2.msra.mxu0 0.0
  %621 = vmatprep.subr.mxu0 0.0
  %622 = vmatpush2.msra.mxu0 0.0
  %623 = vmatprep.subr.mxu0 0.0
  %624 = vmatpush2.msra.mxu0 0.0
  %625 = vmatprep.subr.mxu0 0.0
  %626 = vmatpush2.msra.mxu0 0.0
  %627 = vmatprep.subr.mxu0 0.0
  %628 = vmatpush2.msra.mxu0 0.0
  %629 = vmatprep.subr.mxu0 0.0
  %630 = vmatpush2.msra.mxu0 0.0
  %631 = vmatprep.subr.mxu0 0.0
  %632 = vmatpush2.msra.mxu0 0.0
  %633 = vmatprep.mubr.f32.mxu0 0.0
  %v634 = vand.u32 %v529, 4294901760
  %v635 = vsub.f32 %v529, %v634
  %v636 = vand.u32 %v635, 4294901760
  %v637 = vsub.f32 %v635, %v636
  %v638 = vand.u32 %v637, 4294901760
  %639 = vmatmul.mubr.f32.gmra.mxu0 %v638
  %v640 = vpop.f32.mrf.mxu0
  %v641 = vadd.f32 %v551, %v640
  %v642 = vpop.f32.mrf.mxu0
  %643 = vdwg.mxu0
  %644 = vmatprep.subr.mxu0 0.0
  %v645 = vand.u32 %v545, 4294901760
  %v646 = vsub.f32 %v545, %v645
  %v647 = vand.u32 %v646, 4294901760
  %v648 = vsub.f32 %v646, %v647
  %v649 = vand.u32 %v648, 4294901760
  %650 = vmatpush1.msra.mxu0 %v649
  %651 = vmatprep.subr.mxu0 0.0
  %v652 = vand.u32 %v544, 4294901760
  %v653 = vsub.f32 %v544, %v652
  %v654 = vand.u32 %v653, 4294901760
  %v655 = vsub.f32 %v653, %v654
  %v656 = vand.u32 %v655, 4294901760
  %657 = vmatpush1.msra.mxu0 %v656
  %658 = vmatprep.subr.mxu0 0.0
  %v659 = vand.u32 %v543, 4294901760
  %v660 = vsub.f32 %v543, %v659
  %v661 = vand.u32 %v660, 4294901760
  %v662 = vsub.f32 %v660, %v661
  %v663 = vand.u32 %v662, 4294901760
  %664 = vmatpush1.msra.mxu0 %v663
  %665 = vmatprep.subr.mxu0 0.0
  %v666 = vand.u32 %v542, 4294901760
  %v667 = vsub.f32 %v542, %v666
  %v668 = vand.u32 %v667, 4294901760
  %v669 = vsub.f32 %v667, %v668
  %v670 = vand.u32 %v669, 4294901760
  %671 = vmatpush1.msra.mxu0 %v670
  %672 = vmatprep.subr.mxu0 0.0
  %v673 = vand.u32 %v541, 4294901760
  %v674 = vsub.f32 %v541, %v673
  %v675 = vand.u32 %v674, 4294901760
  %v676 = vsub.f32 %v674, %v675
  %v677 = vand.u32 %v676, 4294901760
  %678 = vmatpush1.msra.mxu0 %v677
  %679 = vmatprep.subr.mxu0 0.0
  %v680 = vand.u32 %v540, 4294901760
  %v681 = vsub.f32 %v540, %v680
  %v682 = vand.u32 %v681, 4294901760
  %v683 = vsub.f32 %v681, %v682
  %v684 = vand.u32 %v683, 4294901760
  %685 = vmatpush1.msra.mxu0 %v684
  %686 = vmatprep.subr.mxu0 0.0
  %v687 = vand.u32 %v539, 4294901760
  %v688 = vsub.f32 %v539, %v687
  %v689 = vand.u32 %v688, 4294901760
  %v690 = vsub.f32 %v688, %v689
  %v691 = vand.u32 %v690, 4294901760
  %692 = vmatpush1.msra.mxu0 %v691
  %693 = vmatprep.subr.mxu0 0.0
  %v694 = vand.u32 %v538, 4294901760
  %v695 = vsub.f32 %v538, %v694
  %v696 = vand.u32 %v695, 4294901760
  %v697 = vsub.f32 %v695, %v696
  %v698 = vand.u32 %v697, 4294901760
  %699 = vmatpush1.msra.mxu0 %v698
  %700 = vmatprep.subr.mxu0 0.0
  %v701 = vand.u32 %v537, 4294901760
  %v702 = vsub.f32 %v537, %v701
  %v703 = vand.u32 %v702, 4294901760
  %v704 = vsub.f32 %v702, %v703
  %v705 = vand.u32 %v704, 4294901760
  %706 = vmatpush1.msra.mxu0 %v705
  %707 = vmatprep.subr.mxu0 0.0
  %v708 = vand.u32 %v536, 4294901760
  %v709 = vsub.f32 %v536, %v708
  %v710 = vand.u32 %v709, 4294901760
  %v711 = vsub.f32 %v709, %v710
  %v712 = vand.u32 %v711, 4294901760
  %713 = vmatpush1.msra.mxu0 %v712
  %714 = vmatprep.subr.mxu0 0.0
  %v715 = vand.u32 %v535, 4294901760
  %v716 = vsub.f32 %v535, %v715
  %v717 = vand.u32 %v716, 4294901760
  %v718 = vsub.f32 %v716, %v717
  %v719 = vand.u32 %v718, 4294901760
  %720 = vmatpush1.msra.mxu0 %v719
  %721 = vmatprep.subr.mxu0 0.0
  %v722 = vand.u32 %v534, 4294901760
  %v723 = vsub.f32 %v534, %v722
  %v724 = vand.u32 %v723, 4294901760
  %v725 = vsub.f32 %v723, %v724
  %v726 = vand.u32 %v725, 4294901760
  %727 = vmatpush1.msra.mxu0 %v726
  %728 = vmatprep.subr.mxu0 0.0
  %v729 = vand.u32 %v533, 4294901760
  %v730 = vsub.f32 %v533, %v729
  %v731 = vand.u32 %v730, 4294901760
  %v732 = vsub.f32 %v730, %v731
  %v733 = vand.u32 %v732, 4294901760
  %734 = vmatpush1.msra.mxu0 %v733
  %735 = vmatprep.subr.mxu0 0.0
  %v736 = vand.u32 %v532, 4294901760
  %v737 = vsub.f32 %v532, %v736
  %v738 = vand.u32 %v737, 4294901760
  %v739 = vsub.f32 %v737, %v738
  %v740 = vand.u32 %v739, 4294901760
  %741 = vmatpush1.msra.mxu0 %v740
  %742 = vmatprep.subr.mxu0 0.0
  %v743 = vand.u32 %v531, 4294901760
  %v744 = vsub.f32 %v531, %v743
  %v745 = vand.u32 %v744, 4294901760
  %v746 = vsub.f32 %v744, %v745
  %v747 = vand.u32 %v746, 4294901760
  %748 = vmatpush1.msra.mxu0 %v747
  %749 = vmatprep.subr.mxu0 0.0
  %v750 = vand.u32 %v530, 4294901760
  %v751 = vsub.f32 %v530, %v750
  %v752 = vand.u32 %v751, 4294901760
  %v753 = vsub.f32 %v751, %v752
  %v754 = vand.u32 %v753, 4294901760
  %755 = vmatpush1.msra.mxu0 %v754
  %756 = vmatprep.subr.mxu0 0.0
  %757 = vmatpush2.msra.mxu0 0.0
  %758 = vmatprep.subr.mxu0 0.0
  %759 = vmatpush2.msra.mxu0 0.0
  %760 = vmatprep.subr.mxu0 0.0
  %761 = vmatpush2.msra.mxu0 0.0
  %762 = vmatprep.subr.mxu0 0.0
  %763 = vmatpush2.msra.mxu0 0.0
  %764 = vmatprep.subr.mxu0 0.0
  %765 = vmatpush2.msra.mxu0 0.0
  %766 = vmatprep.subr.mxu0 0.0
  %767 = vmatpush2.msra.mxu0 0.0
  %768 = vmatprep.subr.mxu0 0.0
  %769 = vmatpush2.msra.mxu0 0.0
  %770 = vmatprep.subr.mxu0 0.0
  %771 = vmatpush2.msra.mxu0 0.0
  %772 = vmatprep.subr.mxu0 0.0
  %773 = vmatpush2.msra.mxu0 0.0
  %774 = vmatprep.subr.mxu0 0.0
  %775 = vmatpush2.msra.mxu0 0.0
  %776 = vmatprep.subr.mxu0 0.0
  %777 = vmatpush2.msra.mxu0 0.0
  %778 = vmatprep.subr.mxu0 0.0
  %779 = vmatpush2.msra.mxu0 0.0
  %780 = vmatprep.subr.mxu0 0.0
  %781 = vmatpush2.msra.mxu0 0.0
  %782 = vmatprep.subr.mxu0 0.0
  %783 = vmatpush2.msra.mxu0 0.0
  %784 = vmatprep.subr.mxu0 0.0
  %785 = vmatpush2.msra.mxu0 0.0
  %786 = vmatprep.subr.mxu0 0.0
  %787 = vmatpush2.msra.mxu0 0.0
  %788 = vmatprep.mubr.f32.mxu0 0.0
  %v789 = vand.u32 %v529, 4294901760
  %790 = vmatmul.mubr.f32.gmra.mxu0 %v789
  %v791 = vpop.f32.mrf.mxu0
  %v792 = vadd.f32 %v641, %v791
  %v793 = vpop.f32.mrf.mxu0
  %794 = vdwg.mxu0
  %795 = vmatprep.subr.mxu0 0.0
  %v796 = vand.u32 %v545, 4294901760
  %v797 = vsub.f32 %v545, %v796
  %798 = vmatpush1.msra.mxu0 %v797
  %799 = vmatprep.subr.mxu0 0.0
  %v800 = vand.u32 %v544, 4294901760
  %v801 = vsub.f32 %v544, %v800
  %802 = vmatpush1.msra.mxu0 %v801
  %803 = vmatprep.subr.mxu0 0.0
  %v804 = vand.u32 %v543, 4294901760
  %v805 = vsub.f32 %v543, %v804
  %806 = vmatpush1.msra.mxu0 %v805
  %807 = vmatprep.subr.mxu0 0.0
  %v808 = vand.u32 %v542, 4294901760
  %v809 = vsub.f32 %v542, %v808
  %810 = vmatpush1.msra.mxu0 %v809
  %811 = vmatprep.subr.mxu0 0.0
  %v812 = vand.u32 %v541, 4294901760
  %v813 = vsub.f32 %v541, %v812
  %814 = vmatpush1.msra.mxu0 %v813
  %815 = vmatprep.subr.mxu0 0.0
  %v816 = vand.u32 %v540, 4294901760
  %v817 = vsub.f32 %v540, %v816
  %818 = vmatpush1.msra.mxu0 %v817
  %819 = vmatprep.subr.mxu0 0.0
  %v820 = vand.u32 %v539, 4294901760
  %v821 = vsub.f32 %v539, %v820
  %822 = vmatpush1.msra.mxu0 %v821
  %823 = vmatprep.subr.mxu0 0.0
  %v824 = vand.u32 %v538, 4294901760
  %v825 = vsub.f32 %v538, %v824
  %826 = vmatpush1.msra.mxu0 %v825
  %827 = vmatprep.subr.mxu0 0.0
  %v828 = vand.u32 %v537, 4294901760
  %v829 = vsub.f32 %v537, %v828
  %830 = vmatpush1.msra.mxu0 %v829
  %831 = vmatprep.subr.mxu0 0.0
  %v832 = vand.u32 %v536, 4294901760
  %v833 = vsub.f32 %v536, %v832
  %834 = vmatpush1.msra.mxu0 %v833
  %835 = vmatprep.subr.mxu0 0.0
  %v836 = vand.u32 %v535, 4294901760
  %v837 = vsub.f32 %v535, %v836
  %838 = vmatpush1.msra.mxu0 %v837
  %839 = vmatprep.subr.mxu0 0.0
  %v840 = vand.u32 %v534, 4294901760
  %v841 = vsub.f32 %v534, %v840
  %842 = vmatpush1.msra.mxu0 %v841
  %843 = vmatprep.subr.mxu0 0.0
  %v844 = vand.u32 %v533, 4294901760
  %v845 = vsub.f32 %v533, %v844
  %846 = vmatpush1.msra.mxu0 %v845
  %847 = vmatprep.subr.mxu0 0.0
  %v848 = vand.u32 %v532, 4294901760
  %v849 = vsub.f32 %v532, %v848
  %850 = vmatpush1.msra.mxu0 %v849
  %851 = vmatprep.subr.mxu0 0.0
  %v852 = vand.u32 %v531, 4294901760
  %v853 = vsub.f32 %v531, %v852
  %854 = vmatpush1.msra.mxu0 %v853
  %855 = vmatprep.subr.mxu0 0.0
  %v856 = vand.u32 %v530, 4294901760
  %v857 = vsub.f32 %v530, %v856
  %858 = vmatpush1.msra.mxu0 %v857
  %859 = vmatprep.subr.mxu0 0.0
  %860 = vmatpush2.msra.mxu0 0.0
  %861 = vmatprep.subr.mxu0 0.0
  %862 = vmatpush2.msra.mxu0 0.0
  %863 = vmatprep.subr.mxu0 0.0
  %864 = vmatpush2.msra.mxu0 0.0
  %865 = vmatprep.subr.mxu0 0.0
  %866 = vmatpush2.msra.mxu0 0.0
  %867 = vmatprep.subr.mxu0 0.0
  %868 = vmatpush2.msra.mxu0 0.0
  %869 = vmatprep.subr.mxu0 0.0
  %870 = vmatpush2.msra.mxu0 0.0
  %871 = vmatprep.subr.mxu0 0.0
  %872 = vmatpush2.msra.mxu0 0.0
  %873 = vmatprep.subr.mxu0 0.0
  %874 = vmatpush2.msra.mxu0 0.0
  %875 = vmatprep.subr.mxu0 0.0
  %876 = vmatpush2.msra.mxu0 0.0
  %877 = vmatprep.subr.mxu0 0.0
  %878 = vmatpush2.msra.mxu0 0.0
  %879 = vmatprep.subr.mxu0 0.0
  %880 = vmatpush2.msra.mxu0 0.0
  %881 = vmatprep.subr.mxu0 0.0
  %882 = vmatpush2.msra.mxu0 0.0
  %883 = vmatprep.subr.mxu0 0.0
  %884 = vmatpush2.msra.mxu0 0.0
  %885 = vmatprep.subr.mxu0 0.0
  %886 = vmatpush2.msra.mxu0 0.0
  %887 = vmatprep.subr.mxu0 0.0
  %888 = vmatpush2.msra.mxu0 0.0
  %889 = vmatprep.subr.mxu0 0.0
  %890 = vmatpush2.msra.mxu0 0.0
  %891 = vmatprep.mubr.f32.mxu0 0.0
  %v892 = vand.u32 %v529, 4294901760
  %v893 = vsub.f32 %v529, %v892
  %894 = vmatmul.mubr.f32.gmra.mxu0 %v893
  %v895 = vpop.f32.mrf.mxu0
  %v896 = vadd.f32 %v792, %v895
  %v897 = vpop.f32.mrf.mxu0
  %898 = vdwg.mxu0
  %899 = vmatprep.subr.mxu0 0.0
  %v900 = vand.u32 %v545, 4294901760
  %901 = vmatpush1.msra.mxu0 %v900
  %902 = vmatprep.subr.mxu0 0.0
  %v903 = vand.u32 %v544, 4294901760
  %904 = vmatpush1.msra.mxu0 %v903
  %905 = vmatprep.subr.mxu0 0.0
  %v906 = vand.u32 %v543, 4294901760
  %907 = vmatpush1.msra.mxu0 %v906
  %908 = vmatprep.subr.mxu0 0.0
  %v909 = vand.u32 %v542, 4294901760
  %910 = vmatpush1.msra.mxu0 %v909
  %911 = vmatprep.subr.mxu0 0.0
  %v912 = vand.u32 %v541, 4294901760
  %913 = vmatpush1.msra.mxu0 %v912
  %914 = vmatprep.subr.mxu0 0.0
  %v915 = vand.u32 %v540, 4294901760
  %916 = vmatpush1.msra.mxu0 %v915
  %917 = vmatprep.subr.mxu0 0.0
  %v918 = vand.u32 %v539, 4294901760
  %919 = vmatpush1.msra.mxu0 %v918
  %920 = vmatprep.subr.mxu0 0.0
  %v921 = vand.u32 %v538, 4294901760
  %922 = vmatpush1.msra.mxu0 %v921
  %923 = vmatprep.subr.mxu0 0.0
  %v924 = vand.u32 %v537, 4294901760
  %925 = vmatpush1.msra.mxu0 %v924
  %926 = vmatprep.subr.mxu0 0.0
  %v927 = vand.u32 %v536, 4294901760
  %928 = vmatpush1.msra.mxu0 %v927
  %929 = vmatprep.subr.mxu0 0.0
  %v930 = vand.u32 %v535, 4294901760
  %931 = vmatpush1.msra.mxu0 %v930
  %932 = vmatprep.subr.mxu0 0.0
  %v933 = vand.u32 %v534, 4294901760
  %934 = vmatpush1.msra.mxu0 %v933
  %935 = vmatprep.subr.mxu0 0.0
  %v936 = vand.u32 %v533, 4294901760
  %937 = vmatpush1.msra.mxu0 %v936
  %938 = vmatprep.subr.mxu0 0.0
  %v939 = vand.u32 %v532, 4294901760
  %940 = vmatpush1.msra.mxu0 %v939
  %941 = vmatprep.subr.mxu0 0.0
  %v942 = vand.u32 %v531, 4294901760
  %943 = vmatpush1.msra.mxu0 %v942
  %944 = vmatprep.subr.mxu0 0.0
  %v945 = vand.u32 %v530, 4294901760
  %946 = vmatpush1.msra.mxu0 %v945
  %947 = vmatprep.subr.mxu0 0.0
  %948 = vmatpush2.msra.mxu0 0.0
  %949 = vmatprep.subr.mxu0 0.0
  %950 = vmatpush2.msra.mxu0 0.0
  %951 = vmatprep.subr.mxu0 0.0
  %952 = vmatpush2.msra.mxu0 0.0
  %953 = vmatprep.subr.mxu0 0.0
  %954 = vmatpush2.msra.mxu0 0.0
  %955 = vmatprep.subr.mxu0 0.0
  %956 = vmatpush2.msra.mxu0 0.0
  %957 = vmatprep.subr.mxu0 0.0
  %958 = vmatpush2.msra.mxu0 0.0
  %959 = vmatprep.subr.mxu0 0.0
  %960 = vmatpush2.msra.mxu0 0.0
  %961 = vmatprep.subr.mxu0 0.0
  %962 = vmatpush2.msra.mxu0 0.0
  %963 = vmatprep.subr.mxu0 0.0
  %964 = vmatpush2.msra.mxu0 0.0
  %965 = vmatprep.subr.mxu0 0.0
  %966 = vmatpush2.msra.mxu0 0.0
  %967 = vmatprep.subr.mxu0 0.0
  %968 = vmatpush2.msra.mxu0 0.0
  %969 = vmatprep.subr.mxu0 0.0
  %970 = vmatpush2.msra.mxu0 0.0
  %971 = vmatprep.subr.mxu0 0.0
  %972 = vmatpush2.msra.mxu0 0.0
  %973 = vmatprep.subr.mxu0 0.0
  %974 = vmatpush2.msra.mxu0 0.0
  %975 = vmatprep.subr.mxu0 0.0
  %976 = vmatpush2.msra.mxu0 0.0
  %977 = vmatprep.subr.mxu0 0.0
  %978 = vmatpush2.msra.mxu0 0.0
  %979 = vmatprep.mubr.f32.mxu0 0.0
  %v980 = vand.u32 %v529, 4294901760
  %v981 = vsub.f32 %v529, %v980
  %v982 = vand.u32 %v981, 4294901760
  %983 = vmatmul.mubr.f32.gmra.mxu0 %v982
  %v984 = vpop.f32.mrf.mxu0
  %v985 = vadd.f32 %v896, %v984
  %v986 = vpop.f32.mrf.mxu0
  %987 = vdwg.mxu0
  %988 = vmatprep.subr.mxu0 0.0
  %v989 = vand.u32 %v545, 4294901760
  %v990 = vsub.f32 %v545, %v989
  %v991 = vand.u32 %v990, 4294901760
  %992 = vmatpush1.msra.mxu0 %v991
  %993 = vmatprep.subr.mxu0 0.0
  %v994 = vand.u32 %v544, 4294901760
  %v995 = vsub.f32 %v544, %v994
  %v996 = vand.u32 %v995, 4294901760
  %997 = vmatpush1.msra.mxu0 %v996
  %998 = vmatprep.subr.mxu0 0.0
  %v999 = vand.u32 %v543, 4294901760
  %v1000 = vsub.f32 %v543, %v999
  %v1001 = vand.u32 %v1000, 4294901760
  %1002 = vmatpush1.msra.mxu0 %v1001
  %1003 = vmatprep.subr.mxu0 0.0
  %v1004 = vand.u32 %v542, 4294901760
  %v1005 = vsub.f32 %v542, %v1004
  %v1006 = vand.u32 %v1005, 4294901760
  %1007 = vmatpush1.msra.mxu0 %v1006
  %1008 = vmatprep.subr.mxu0 0.0
  %v1009 = vand.u32 %v541, 4294901760
  %v1010 = vsub.f32 %v541, %v1009
  %v1011 = vand.u32 %v1010, 4294901760
  %1012 = vmatpush1.msra.mxu0 %v1011
  %1013 = vmatprep.subr.mxu0 0.0
  %v1014 = vand.u32 %v540, 4294901760
  %v1015 = vsub.f32 %v540, %v1014
  %v1016 = vand.u32 %v1015, 4294901760
  %1017 = vmatpush1.msra.mxu0 %v1016
  %1018 = vmatprep.subr.mxu0 0.0
  %v1019 = vand.u32 %v539, 4294901760
  %v1020 = vsub.f32 %v539, %v1019
  %v1021 = vand.u32 %v1020, 4294901760
  %1022 = vmatpush1.msra.mxu0 %v1021
  %1023 = vmatprep.subr.mxu0 0.0
  %v1024 = vand.u32 %v538, 4294901760
  %v1025 = vsub.f32 %v538, %v1024
  %v1026 = vand.u32 %v1025, 4294901760
  %1027 = vmatpush1.msra.mxu0 %v1026
  %1028 = vmatprep.subr.mxu0 0.0
  %v1029 = vand.u32 %v537, 4294901760
  %v1030 = vsub.f32 %v537, %v1029
  %v1031 = vand.u32 %v1030, 4294901760
  %1032 = vmatpush1.msra.mxu0 %v1031
  %1033 = vmatprep.subr.mxu0 0.0
  %v1034 = vand.u32 %v536, 4294901760
  %v1035 = vsub.f32 %v536, %v1034
  %v1036 = vand.u32 %v1035, 4294901760
  %1037 = vmatpush1.msra.mxu0 %v1036
  %1038 = vmatprep.subr.mxu0 0.0
  %v1039 = vand.u32 %v535, 4294901760
  %v1040 = vsub.f32 %v535, %v1039
  %v1041 = vand.u32 %v1040, 4294901760
  %1042 = vmatpush1.msra.mxu0 %v1041
  %1043 = vmatprep.subr.mxu0 0.0
  %v1044 = vand.u32 %v534, 4294901760
  %v1045 = vsub.f32 %v534, %v1044
  %v1046 = vand.u32 %v1045, 4294901760
  %1047 = vmatpush1.msra.mxu0 %v1046
  %1048 = vmatprep.subr.mxu0 0.0
  %v1049 = vand.u32 %v533, 4294901760
  %v1050 = vsub.f32 %v533, %v1049
  %v1051 = vand.u32 %v1050, 4294901760
  %1052 = vmatpush1.msra.mxu0 %v1051
  %1053 = vmatprep.subr.mxu0 0.0
  %v1054 = vand.u32 %v532, 4294901760
  %v1055 = vsub.f32 %v532, %v1054
  %v1056 = vand.u32 %v1055, 4294901760
  %1057 = vmatpush1.msra.mxu0 %v1056
  %1058 = vmatprep.subr.mxu0 0.0
  %v1059 = vand.u32 %v531, 4294901760
  %v1060 = vsub.f32 %v531, %v1059
  %v1061 = vand.u32 %v1060, 4294901760
  %1062 = vmatpush1.msra.mxu0 %v1061
  %1063 = vmatprep.subr.mxu0 0.0
  %v1064 = vand.u32 %v530, 4294901760
  %v1065 = vsub.f32 %v530, %v1064
  %v1066 = vand.u32 %v1065, 4294901760
  %1067 = vmatpush1.msra.mxu0 %v1066
  %1068 = vmatprep.subr.mxu0 0.0
  %1069 = vmatpush2.msra.mxu0 0.0
  %1070 = vmatprep.subr.mxu0 0.0
  %1071 = vmatpush2.msra.mxu0 0.0
  %1072 = vmatprep.subr.mxu0 0.0
  %1073 = vmatpush2.msra.mxu0 0.0
  %1074 = vmatprep.subr.mxu0 0.0
  %1075 = vmatpush2.msra.mxu0 0.0
  %1076 = vmatprep.subr.mxu0 0.0
  %1077 = vmatpush2.msra.mxu0 0.0
  %1078 = vmatprep.subr.mxu0 0.0
  %1079 = vmatpush2.msra.mxu0 0.0
  %1080 = vmatprep.subr.mxu0 0.0
  %1081 = vmatpush2.msra.mxu0 0.0
  %1082 = vmatprep.subr.mxu0 0.0
  %1083 = vmatpush2.msra.mxu0 0.0
  %1084 = vmatprep.subr.mxu0 0.0
  %1085 = vmatpush2.msra.mxu0 0.0
  %1086 = vmatprep.subr.mxu0 0.0
  %1087 = vmatpush2.msra.mxu0 0.0
  %1088 = vmatprep.subr.mxu0 0.0
  %1089 = vmatpush2.msra.mxu0 0.0
  %1090 = vmatprep.subr.mxu0 0.0
  %1091 = vmatpush2.msra.mxu0 0.0
  %1092 = vmatprep.subr.mxu0 0.0
  %1093 = vmatpush2.msra.mxu0 0.0
  %1094 = vmatprep.subr.mxu0 0.0
  %1095 = vmatpush2.msra.mxu0 0.0
  %1096 = vmatprep.subr.mxu0 0.0
  %1097 = vmatpush2.msra.mxu0 0.0
  %1098 = vmatprep.subr.mxu0 0.0
  %1099 = vmatpush2.msra.mxu0 0.0
  %1100 = vmatprep.mubr.f32.mxu0 0.0
  %v1101 = vand.u32 %v529, 4294901760
  %1102 = vmatmul.mubr.f32.gmra.mxu0 %v1101
  %v1103 = vpop.f32.mrf.mxu0
  %v1104 = vadd.f32 %v985, %v1103
  %v1105 = vpop.f32.mrf.mxu0
  %1106 = vdwg.mxu0
  %1107 = vmatprep.subr.mxu0 0.0
  %v1108 = vand.u32 %v545, 4294901760
  %1109 = vmatpush1.msra.mxu0 %v1108
  %1110 = vmatprep.subr.mxu0 0.0
  %v1111 = vand.u32 %v544, 4294901760
  %1112 = vmatpush1.msra.mxu0 %v1111
  %1113 = vmatprep.subr.mxu0 0.0
  %v1114 = vand.u32 %v543, 4294901760
  %1115 = vmatpush1.msra.mxu0 %v1114
  %1116 = vmatprep.subr.mxu0 0.0
  %v1117 = vand.u32 %v542, 4294901760
  %1118 = vmatpush1.msra.mxu0 %v1117
  %1119 = vmatprep.subr.mxu0 0.0
  %v1120 = vand.u32 %v541, 4294901760
  %1121 = vmatpush1.msra.mxu0 %v1120
  %1122 = vmatprep.subr.mxu0 0.0
  %v1123 = vand.u32 %v540, 4294901760
  %1124 = vmatpush1.msra.mxu0 %v1123
  %1125 = vmatprep.subr.mxu0 0.0
  %v1126 = vand.u32 %v539, 4294901760
  %1127 = vmatpush1.msra.mxu0 %v1126
  %1128 = vmatprep.subr.mxu0 0.0
  %v1129 = vand.u32 %v538, 4294901760
  %1130 = vmatpush1.msra.mxu0 %v1129
  %1131 = vmatprep.subr.mxu0 0.0
  %v1132 = vand.u32 %v537, 4294901760
  %1133 = vmatpush1.msra.mxu0 %v1132
  %1134 = vmatprep.subr.mxu0 0.0
  %v1135 = vand.u32 %v536, 4294901760
  %1136 = vmatpush1.msra.mxu0 %v1135
  %1137 = vmatprep.subr.mxu0 0.0
  %v1138 = vand.u32 %v535, 4294901760
  %1139 = vmatpush1.msra.mxu0 %v1138
  %1140 = vmatprep.subr.mxu0 0.0
  %v1141 = vand.u32 %v534, 4294901760
  %1142 = vmatpush1.msra.mxu0 %v1141
  %1143 = vmatprep.subr.mxu0 0.0
  %v1144 = vand.u32 %v533, 4294901760
  %1145 = vmatpush1.msra.mxu0 %v1144
  %1146 = vmatprep.subr.mxu0 0.0
  %v1147 = vand.u32 %v532, 4294901760
  %1148 = vmatpush1.msra.mxu0 %v1147
  %1149 = vmatprep.subr.mxu0 0.0
  %v1150 = vand.u32 %v531, 4294901760
  %1151 = vmatpush1.msra.mxu0 %v1150
  %1152 = vmatprep.subr.mxu0 0.0
  %v1153 = vand.u32 %v530, 4294901760
  %1154 = vmatpush1.msra.mxu0 %v1153
  %1155 = vmatprep.subr.mxu0 0.0
  %1156 = vmatpush2.msra.mxu0 0.0
  %1157 = vmatprep.subr.mxu0 0.0
  %1158 = vmatpush2.msra.mxu0 0.0
  %1159 = vmatprep.subr.mxu0 0.0
  %1160 = vmatpush2.msra.mxu0 0.0
  %1161 = vmatprep.subr.mxu0 0.0
  %1162 = vmatpush2.msra.mxu0 0.0
  %1163 = vmatprep.subr.mxu0 0.0
  %1164 = vmatpush2.msra.mxu0 0.0
  %1165 = vmatprep.subr.mxu0 0.0
  %1166 = vmatpush2.msra.mxu0 0.0
  %1167 = vmatprep.subr.mxu0 0.0
  %1168 = vmatpush2.msra.mxu0 0.0
  %1169 = vmatprep.subr.mxu0 0.0
  %1170 = vmatpush2.msra.mxu0 0.0
  %1171 = vmatprep.subr.mxu0 0.0
  %1172 = vmatpush2.msra.mxu0 0.0
  %1173 = vmatprep.subr.mxu0 0.0
  %1174 = vmatpush2.msra.mxu0 0.0
  %1175 = vmatprep.subr.mxu0 0.0
  %1176 = vmatpush2.msra.mxu0 0.0
  %1177 = vmatprep.subr.mxu0 0.0
  %1178 = vmatpush2.msra.mxu0 0.0
  %1179 = vmatprep.subr.mxu0 0.0
  %1180 = vmatpush2.msra.mxu0 0.0
  %1181 = vmatprep.subr.mxu0 0.0
  %1182 = vmatpush2.msra.mxu0 0.0
  %1183 = vmatprep.subr.mxu0 0.0
  %1184 = vmatpush2.msra.mxu0 0.0
  %1185 = vmatprep.subr.mxu0 0.0
  %1186 = vmatpush2.msra.mxu0 0.0
  %1187 = vmatprep.mubr.f32.mxu0 0.0
  %v1188 = vand.u32 %v529, 4294901760
  %1189 = vmatmul.mubr.f32.gmra.mxu0 %v1188
  %v1190 = vpop.f32.mrf.mxu0
  %v1191 = vadd.f32 %v1104, %v1190
  %v1192 = vpop.f32.mrf.mxu0
  %1193 = vdwg.mxu0
  %v1194 = vmax.f32 %v1191, 0.0
  %v1195 = vld [vmem:[%s5] sm:$0x1]
  %v1197 = vlaneseq
  %v1198 = vshrl.u32 %v1197, 7
  %v1199 = vsub.s32 0, %v1198
  %v1200 = vrot.slane %v1195, %v1199
  %v1202 = vmul.f32 %v1194, %v1200
  %vm1203 = vcmask 523264
  %v1204 = vsel %vm1203, %v1202, 0.0
  %1205 = vadd.xlane.f32.xlu0 %v1204
  %v1206 = vpop.xlane.xlu0 %1205
  %v1207 = vld [vmem:[#allocation2] sm:$0x1]
  %v1209 = vlaneseq
  %v1210 = vshrl.u32 %v1209, 7
  %v1211 = vsub.s32 0, %v1210
  %v1212 = vrot.slane %v1207, %v1211
  %v1214 = vadd.f32 %v1206, %v1212
  %vm1215 = vcmask 7168
  %1216 = vst.msk [vmem:[%s7] sm:$0xff] %vm1215, %v1214
  // Predicated region
  $region30: #{tpu_custom_call.1} parent=0 // pred_check
    _
  $region31: #{tpu_custom_call.1} parent=0 // pred_check_branch
    %1218 = sbr.rel (0) target = $region33
  $region32: #{tpu_custom_call.1} parent=0 // pred_region
    _
  $region33: #{tpu_custom_call.1} parent=0 // pred_fallthru
    _
  // Predicated region
  $region34: #{tpu_custom_call.1} parent=0 // pred_check
    _
  $region35: #{tpu_custom_call.1} parent=0 // pred_check_branch
    %1220 = sbr.rel (0) target = $region37
  $region36: #{tpu_custom_call.1} parent=0 // pred_region
    _
  $region37: #{tpu_custom_call.1} parent=0 // pred_fallthru
    _

</llo_original>
